<compile_context>
chip_gen: v6e
topology: v6e:2x2x1
jax: 0.10.0
libtpu: 0.0.40
codegen_flags: <defaults>
</compile_context>

<pallas_src>
import functools

import jax
import jax.numpy as jnp
from jax.experimental import pallas as pl
from jax.experimental.pallas import tpu as pltpu


# ---------------------------------------------------------------------------
# Fused kernel: one grid step = `bt` full batches (all N nodes each).
# ---------------------------------------------------------------------------
def _fused_gru_kernel(x_col_ref, h_ref,
                      w1x_ref, w1h_ref, b1_ref,
                      w2x_ref, w2bd_ref, b2p_ref,
                      out_ref, h32_ref, *, bt, n_nodes, hidden):
    H = hidden
    N = n_nodes
    M = bt * N          # rows of h in this block (node layout)
    Mp = M // 2         # rows in pair layout

    # Single HBM stream for h (bf16).  Cast once to f32 and keep the f32 copy
    # in VMEM scratch so the even/odd rows (pair layout) can be re-read with a
    # strided slice — no second HBM DMA and no strided load on a packed dtype.
    h32 = h_ref[...].astype(jnp.float32)            # (M, H)
    h32_ref[...] = h32

    x_col = x_col_ref[...]                          # (M, 1) f32
    w1x = w1x_ref[...]                              # (1, 2H)
    b1 = b1_ref[...]                                # (1, 2H)

    # Gate pre-activations for ALL bt batches in ONE MXU matmul (concat with x
    # eliminated by the weight split: W1 = [w1x ; w1h]).
    z1 = jnp.dot(h32, w1h_ref[...], preferred_element_type=jnp.float32)
    z1 = z1 + x_col * w1x + b1                      # (M, 2H)
    z1 = 0.5 * (jnp.tanh(0.5 * z1) + 1.0)           # sigmoid via one EUP tanh

    # torch.chunk(conc, 2, dim=1) on the flat (B, N*2H) gates: per batch, r is
    # the first N/2 rows of that batch's z1 block and u the last N/2 rows
    # (T-GCN's "scrambled" flat-split pairing, reproduced exactly).
    if bt == 1:
        r_pair = z1[:N // 2, :]                     # (Mp, 2H)
        u_pair = z1[N // 2:, :]                     # (Mp, 2H)
    else:
        r_pair = jnp.concatenate(
            [z1[b * N: b * N + N // 2, :] for b in range(bt)], axis=0)
        u_pair = jnp.concatenate(
            [z1[b * N + N // 2: (b + 1) * N, :] for b in range(bt)], axis=0)

    # Pair layout of h: row m = [h[2m] | h[2m+1]]  (even/odd sublane rows of
    # the f32 VMEM copy; valid across batch boundaries because N is even).
    he = h32_ref[pl.ds(0, Mp, stride=2), :]         # (Mp, H)
    ho = h32_ref[pl.ds(1, Mp, stride=2), :]         # (Mp, H)
    h_pair = jnp.concatenate([he, ho], axis=-1)     # (Mp, 2H)

    # Same even/odd split for x (x is tiny; strided read of the f32 column).
    xe = x_col_ref[pl.ds(0, Mp, stride=2), :]       # (Mp, 1)
    xo = x_col_ref[pl.ds(1, Mp, stride=2), :]       # (Mp, 1)

    # Candidate state, computed directly in pair layout via the block-diagonal
    # W2 so the second matmul and the final store are single lane-dense ops.
    w2x = w2x_ref[...]                              # (1, H)
    rh_pair = r_pair * h_pair                       # (Mp, 2H)
    c = jnp.dot(rh_pair, w2bd_ref[...], preferred_element_type=jnp.float32)
    c = c + jnp.concatenate([xe * w2x, xo * w2x], axis=-1)
    c = jnp.tanh(c + b2p_ref[...])

    # new_h = u*h + (1-u)*c, one full-width lane-dense store in pair layout.
    out_ref[...] = (u_pair * h_pair + (1.0 - u_pair) * c).astype(out_ref.dtype)


# ---------------------------------------------------------------------------
# Block-size heuristic: VMEM-budget-sized, layout-legal, megacore-friendly.
# ---------------------------------------------------------------------------
def _pick_batches_per_block(B, N, H, requested=None):
    if requested is not None:
        assert B % requested == 0, "batches_per_block must divide batch size"
        return requested
    # Conservative budget (fits default scoped VMEM on v5e/v6e/v7x): per batch
    # we hold the bf16 input + f32 scratch copy of h, z1 (2H lanes), the pair
    # temporaries and double-buffered I/O.
    vmem_budget = 24 * 1024 * 1024
    per_batch_bytes = N * H * 4 * 12 + N * 64
    cap = max(1, vmem_budget // per_batch_bytes)
    if B >= 2:
        cap = min(cap, B // 2)   # >=2 grid steps so v7x can split across its 2 TCs
    # (bt*N) % 16 == 0 keeps every block (bf16 h included) on sublane-tile
    # boundaries without being the full array.
    for bt in range(min(cap, B), 0, -1):
        if B % bt == 0 and (bt * N) % 16 == 0:
            return bt
    for bt in range(min(cap, B) + 1, B + 1):
        if B % bt == 0 and ((bt * N) % 16 == 0 or bt == B):
            return bt
    return B   # full-array blocks are always layout-legal


# ---------------------------------------------------------------------------
# Parameter init (deterministic, matches the PyTorch __init__ shapes)
# ---------------------------------------------------------------------------
def init_gru_cell_params(key, hidden_dim):
    fan_in = hidden_dim + 1
    k1, k2 = jax.random.split(key)

    def xavier_uniform(k, out_dim):
        bound = (6.0 / (fan_in + out_dim)) ** 0.5
        return jax.random.uniform(k, (fan_in, out_dim), jnp.float32, -bound, bound)

    return {
        # GRULinear(hidden, 2*hidden, bias=1.0)
        "W1": xavier_uniform(k1, 2 * hidden_dim),
        "b1": jnp.full((1, 2 * hidden_dim), 1.0, jnp.float32),
        # GRULinear(hidden, hidden, bias=0.0)
        "W2": xavier_uniform(k2, hidden_dim),
        "b2": jnp.zeros((1, hidden_dim), jnp.float32),
    }


# ---------------------------------------------------------------------------
# Forward pass: free reshape views + one fused pallas_call.
# ---------------------------------------------------------------------------
def gru_cell_forward(params, x, h, *, hidden_dim, batches_per_block=None):
    B, N = x.shape
    H = hidden_dim
    assert h.shape == (B, N * H)
    assert N % 2 == 0, "fused kernel assumes an even number of nodes"
    # TODO(synk): odd N puts the flat torch.chunk boundary mid-row; would need a
    # pure-JAX fallback rather than this pair-layout kernel.

    bt = _pick_batches_per_block(B, N, H, batches_per_block)
    M = bt * N

    # Free relayout views (no compute): node-layout column of x; h shipped once
    # in bf16 node layout (dominant HBM stream halved, f32 math in-kernel).
    x_col = x.reshape(B * N, 1).astype(jnp.float32)
    h_bf16 = h.astype(jnp.bfloat16).reshape(B * N, H)

    W1, W2 = params["W1"], params["W2"]
    w1x, w1h = W1[0:1, :], W1[1:, :]
    w2x, w2h = W2[0:1, :], W2[1:, :]
    # Block-diagonal W2: the candidate matmul emits the (.., 2H) pair layout
    # directly (one matmul, one lane-dense store).  On v5e with H > 64 a
    # row-stacked [rh_e; rh_o] @ w2h variant would keep K <= 128 instead.
    w2bd = jnp.zeros((2 * H, 2 * H), jnp.float32)
    w2bd = w2bd.at[:H, :H].set(w2h).at[H:, H:].set(w2h)
    b1 = params["b1"]
    b2p = jnp.concatenate([params["b2"], params["b2"]], axis=1)   # (1, 2H)

    grid = (B // bt,)
    kernel = functools.partial(_fused_gru_kernel, bt=bt, n_nodes=N, hidden=H)

    def row_spec(rows, cols):
        return pl.BlockSpec((rows, cols), lambda i: (i, 0))

    def full_spec(shape):
        return pl.BlockSpec(shape, lambda i: (0, 0))

    out_pair = pl.pallas_call(
        kernel,
        out_shape=jax.ShapeDtypeStruct((B * N // 2, 2 * H), jnp.float32),
        grid=grid,
        in_specs=[
            row_spec(M, 1),               # x column (node layout)
            row_spec(M, H),               # h, bf16, node layout (single HBM stream)
            full_spec((1, 2 * H)),        # W1 x-row
            full_spec((H, 2 * H)),        # W1 h-rows
            full_spec((1, 2 * H)),        # b1
            full_spec((1, H)),            # W2 x-row
            full_spec((2 * H, 2 * H)),    # block-diagonal W2 h-rows
            full_spec((1, 2 * H)),        # b2 duplicated to pair width
        ],
        out_specs=row_spec(M // 2, 2 * H),
        scratch_shapes=[pltpu.VMEM((M, H), jnp.float32)],   # f32 copy of h
        compiler_params=pltpu.CompilerParams(
            dimension_semantics=("parallel",),
            vmem_limit_bytes=64 * 1024 * 1024,
        ),
    )(x_col, h_bf16, w1x, w1h, b1, w2x, w2bd, b2p)

    new_h = out_pair.reshape(B, N * H)
    return new_h, new_h


# ---------------------------------------------------------------------------
# Pure-JAX references.
#   split_weights=True + bf16_hidden=True : kernel-matched (tight check)
#   defaults                              : literal PyTorch mirror (loose check)
# ---------------------------------------------------------------------------
def gru_cell_ref(params, x, h, hidden_dim, *, split_weights=False, bf16_hidden=False):
    B, N = x.shape
    H = hidden_dim
    h_use = h.astype(jnp.bfloat16).astype(jnp.float32) if bf16_hidden else h

    def gru_linear(W, b, inputs, hidden):
        if split_weights:
            out = (hidden.reshape(B * N, H) @ W[1:, :]
                   + inputs.reshape(B * N, 1) * W[0:1, :] + b)
        else:
            cat = jnp.concatenate(
                [inputs.reshape(B, N, 1), hidden.reshape(B, N, H)], axis=2
            ).reshape(B * N, H + 1)
            out = cat @ W + b
        return out.reshape(B, N * W.shape[1])

    conc = jax.nn.sigmoid(gru_linear(params["W1"], params["b1"], x, h_use))
    r, u = jnp.split(conc, 2, axis=1)
    c = jnp.tanh(gru_linear(params["W2"], params["b2"], x, r * h_use))
    return u * h_use + (1.0 - u) * c


# ---------------------------------------------------------------------------
if __name__ == "__main__":
    B, N, H = 2, 16, 32           # batch=2, num_nodes=16, hidden_dim=32
    key = jax.random.PRNGKey(0)
    kp, kx, kh = jax.random.split(key, 3)

    params = init_gru_cell_params(kp, H)
    x = jax.random.normal(kx, (B, N), jnp.float32)           # inputs
    h = jax.random.normal(kh, (B, N * H), jnp.float32)       # hidden_state (flat)

    # Default block heuristic (bt=1 here -> 2 grid steps, megacore-friendly).
    fwd_auto = jax.jit(functools.partial(gru_cell_forward, hidden_dim=H))
    new_h_auto, out_auto = fwd_auto(params, x, h)
    jax.block_until_ready(new_h_auto)
    assert new_h_auto.shape == (B, N * H)

    # Explicit multi-batch block (bt=2 -> exercises the multi-batch chunk split).
    fwd_b2 = jax.jit(functools.partial(gru_cell_forward, hidden_dim=H,
                                       batches_per_block=2))
    new_h_b2, _ = fwd_b2(params, x, h)
    jax.block_until_ready(new_h_b2)

    # Tight check: reference with the kernel's weight split AND bf16-quantized
    # hidden state (identical operands -> insensitive to TPU matmul precision).
    ref_tight = gru_cell_ref(params, x, h, H, split_weights=True, bf16_hidden=True)
    # Loose check: literal PyTorch-mirror math in full f32.
    ref_loose = gru_cell_ref(params, x, h, H)

    for name, got in (("auto", new_h_auto), ("bt=2", new_h_b2)):
        err_t = float(jnp.max(jnp.abs(got - ref_tight)))
        assert jnp.allclose(got, ref_tight, atol=5e-3, rtol=5e-3), (
            f"[{name}] mismatch vs kernel-matched reference, max abs err {err_t}")
        err_l = float(jnp.max(jnp.abs(got - ref_loose)))
        assert jnp.allclose(got, ref_loose, atol=5e-2, rtol=5e-2), (
            f"[{name}] mismatch vs PyTorch-mirror reference, max abs err {err_l}")

    print("KERNEL_OK")
</pallas_src>

<mosaic_0001>
module attributes {stable_mosaic.version = 11 : i64} {
  func.func @_fused_gru_kernel(%arg0: i32, %arg1: memref<16x1xf32, #tpu.memory_space<vmem>>, %arg2: memref<16x32xbf16, #tpu.memory_space<vmem>>, %arg3: memref<1x64xf32, #tpu.memory_space<vmem>>, %arg4: memref<32x64xf32, #tpu.memory_space<vmem>>, %arg5: memref<1x64xf32, #tpu.memory_space<vmem>>, %arg6: memref<1x32xf32, #tpu.memory_space<vmem>>, %arg7: memref<64x64xf32, #tpu.memory_space<vmem>>, %arg8: memref<1x64xf32, #tpu.memory_space<vmem>>, %arg9: memref<8x64xf32, #tpu.memory_space<vmem>>, %arg10: memref<16x32xf32, #tpu.memory_space<vmem>>) attributes {dimension_semantics = [#tpu.dimension_semantics<parallel>], iteration_bounds = array<i64: 2>, scalar_prefetch = 0 : i64, scratch_operands = 1 : i64, tpu.core_type = #tpu.core_type<tc>, window_params = [{transform_indices = @transform_0, window_bounds = array<i64: 16, 1>}, {transform_indices = @transform_1, window_bounds = array<i64: 16, 32>}, {pipeline_mode = #tpu.pipeline_mode<synchronous>, transform_indices = @transform_2, window_bounds = array<i64: 1, 64>}, {pipeline_mode = #tpu.pipeline_mode<synchronous>, transform_indices = @transform_3, window_bounds = array<i64: 32, 64>}, {pipeline_mode = #tpu.pipeline_mode<synchronous>, transform_indices = @transform_4, window_bounds = array<i64: 1, 64>}, {pipeline_mode = #tpu.pipeline_mode<synchronous>, transform_indices = @transform_5, window_bounds = array<i64: 1, 32>}, {pipeline_mode = #tpu.pipeline_mode<synchronous>, transform_indices = @transform_6, window_bounds = array<i64: 64, 64>}, {pipeline_mode = #tpu.pipeline_mode<synchronous>, transform_indices = @transform_7, window_bounds = array<i64: 1, 64>}, {transform_indices = @transform_8, window_bounds = array<i64: 8, 64>}]} {
    %c0 = arith.constant 0 : index
    %c0_0 = arith.constant 0 : index
    %0 = vector.load %arg2[%c0, %c0_0] : memref<16x32xbf16, #tpu.memory_space<vmem>>, vector<16x32xbf16>
    %1 = arith.extf %0 : vector<16x32xbf16> to vector<16x32xf32>
    %c0_1 = arith.constant 0 : index
    %c0_2 = arith.constant 0 : index
    %2 = vector.load %arg10[%c0_1, %c0_2] : memref<16x32xf32, #tpu.memory_space<vmem>>, vector<16x32xf32>
    tpu.vector_store %arg10[%c0_1, %c0_2], %1 {strides = array<i32>} : memref<16x32xf32, #tpu.memory_space<vmem>>, vector<16x32xf32>,
    %c0_3 = arith.constant 0 : index
    %c0_4 = arith.constant 0 : index
    %3 = vector.load %arg1[%c0_3, %c0_4] : memref<16x1xf32, #tpu.memory_space<vmem>>, vector<16x1xf32>
    %c0_5 = arith.constant 0 : index
    %c0_6 = arith.constant 0 : index
    %4 = vector.load %arg3[%c0_5, %c0_6] : memref<1x64xf32, #tpu.memory_space<vmem>>, vector<1x64xf32>
    %c0_7 = arith.constant 0 : index
    %c0_8 = arith.constant 0 : index
    %5 = vector.load %arg5[%c0_7, %c0_8] : memref<1x64xf32, #tpu.memory_space<vmem>>, vector<1x64xf32>
    %c0_9 = arith.constant 0 : index
    %c0_10 = arith.constant 0 : index
    %6 = vector.load %arg4[%c0_9, %c0_10] : memref<32x64xf32, #tpu.memory_space<vmem>>, vector<32x64xf32>
    %cst = arith.constant dense<0.000000e+00> : vector<16x64xf32>
    %7 = tpu.matmul %1, %6, %cst {dimension_numbers = #tpu.dot_dimension_numbers<[1], [0], [0], [1], [0, 0, 1, 1], [], []>} : vector<16x32xf32>, vector<32x64xf32>, vector<16x64xf32> -> vector<16x64xf32>
    %8 = vector.broadcast %3 : vector<16x1xf32> to vector<16x64xf32>
    %9 = vector.broadcast %4 : vector<1x64xf32> to vector<16x64xf32>
    %10 = arith.mulf %8, %9 : vector<16x64xf32>
    %11 = arith.addf %7, %10 : vector<16x64xf32>
    %12 = vector.broadcast %5 : vector<1x64xf32> to vector<16x64xf32>
    %13 = arith.addf %11, %12 : vector<16x64xf32>
    %cst_11 = arith.constant 5.000000e-01 : f32
    %14 = vector.broadcast %cst_11 : f32 to vector<16x64xf32>
    %15 = arith.mulf %14, %13 : vector<16x64xf32>
    %16 = math.tanh %15 : vector<16x64xf32>
    %cst_12 = arith.constant 1.000000e+00 : f32
    %17 = vector.broadcast %cst_12 : f32 to vector<16x64xf32>
    %18 = arith.addf %16, %17 : vector<16x64xf32>
    %cst_13 = arith.constant 5.000000e-01 : f32
    %19 = vector.broadcast %cst_13 : f32 to vector<16x64xf32>
    %20 = arith.mulf %19, %18 : vector<16x64xf32>
    %21 = vector.extract_strided_slice %20 {offsets = [0, 0], sizes = [8, 64], strides = [1, 1]} : vector<16x64xf32> to vector<8x64xf32>
    %22 = vector.extract_strided_slice %20 {offsets = [8, 0], sizes = [8, 64], strides = [1, 1]} : vector<16x64xf32> to vector<8x64xf32>
    %c0_14 = arith.constant 0 : index
    %c0_15 = arith.constant 0 : index
    %23 = tpu.strided_load %arg10[%c0_14, %c0_15] {strides = array<i32: 2, 1>} : memref<16x32xf32, #tpu.memory_space<vmem>>, vector<8x32xf32>
    %c1 = arith.constant 1 : index
    %c0_16 = arith.constant 0 : index
    %24 = tpu.strided_load %arg10[%c1, %c0_16] {strides = array<i32: 2, 1>} : memref<16x32xf32, #tpu.memory_space<vmem>>, vector<8x32xf32>
    %25 = tpu.concatenate %23, %24 in 1 : vector<8x32xf32>, vector<8x32xf32> -> vector<8x64xf32>
    %c0_17 = arith.constant 0 : index
    %c0_18 = arith.constant 0 : index
    %26 = tpu.strided_load %arg1[%c0_17, %c0_18] {strides = array<i32: 2, 1>} : memref<16x1xf32, #tpu.memory_space<vmem>>, vector<8x1xf32>
    %c1_19 = arith.constant 1 : index
    %c0_20 = arith.constant 0 : index
    %27 = tpu.strided_load %arg1[%c1_19, %c0_20] {strides = array<i32: 2, 1>} : memref<16x1xf32, #tpu.memory_space<vmem>>, vector<8x1xf32>
    %c0_21 = arith.constant 0 : index
    %c0_22 = arith.constant 0 : index
    %28 = vector.load %arg6[%c0_21, %c0_22] : memref<1x32xf32, #tpu.memory_space<vmem>>, vector<1x32xf32>
    %29 = arith.mulf %21, %25 : vector<8x64xf32>
    %c0_23 = arith.constant 0 : index
    %c0_24 = arith.constant 0 : index
    %30 = vector.load %arg7[%c0_23, %c0_24] : memref<64x64xf32, #tpu.memory_space<vmem>>, vector<64x64xf32>
    %cst_25 = arith.constant dense<0.000000e+00> : vector<8x64xf32>
    %31 = tpu.matmul %29, %30, %cst_25 {dimension_numbers = #tpu.dot_dimension_numbers<[1], [0], [0], [1], [0, 0, 1, 1], [], []>} : vector<8x64xf32>, vector<64x64xf32>, vector<8x64xf32> -> vector<8x64xf32>
    %32 = vector.broadcast %26 : vector<8x1xf32> to vector<8x32xf32>
    %33 = vector.broadcast %28 : vector<1x32xf32> to vector<8x32xf32>
    %34 = arith.mulf %32, %33 : vector<8x32xf32>
    %35 = vector.broadcast %27 : vector<8x1xf32> to vector<8x32xf32>
    %36 = vector.broadcast %28 : vector<1x32xf32> to vector<8x32xf32>
    %37 = arith.mulf %35, %36 : vector<8x32xf32>
    %38 = tpu.concatenate %34, %37 in 1 : vector<8x32xf32>, vector<8x32xf32> -> vector<8x64xf32>
    %39 = arith.addf %31, %38 : vector<8x64xf32>
    %c0_26 = arith.constant 0 : index
    %c0_27 = arith.constant 0 : index
    %40 = vector.load %arg8[%c0_26, %c0_27] : memref<1x64xf32, #tpu.memory_space<vmem>>, vector<1x64xf32>
    %41 = vector.broadcast %40 : vector<1x64xf32> to vector<8x64xf32>
    %42 = arith.addf %39, %41 : vector<8x64xf32>
    %43 = math.tanh %42 : vector<8x64xf32>
    %44 = arith.mulf %22, %25 : vector<8x64xf32>
    %cst_28 = arith.constant 1.000000e+00 : f32
    %45 = vector.broadcast %cst_28 : f32 to vector<8x64xf32>
    %46 = arith.subf %45, %22 : vector<8x64xf32>
    %47 = arith.mulf %46, %43 : vector<8x64xf32>
    %48 = arith.addf %44, %47 : vector<8x64xf32>
    %c0_29 = arith.constant 0 : index
    %c0_30 = arith.constant 0 : index
    %49 = vector.load %arg9[%c0_29, %c0_30] : memref<8x64xf32, #tpu.memory_space<vmem>>, vector<8x64xf32>
    tpu.vector_store %arg9[%c0_29, %c0_30], %48 {strides = array<i32>} : memref<8x64xf32, #tpu.memory_space<vmem>>, vector<8x64xf32>,
    return
  }
  func.func @transform_0(%arg0: i32) -> (i32, i32) {
    %c0_i32 = arith.constant 0 : i32
    %c0_i32_0 = arith.constant 0 : i32
    return %arg0, %c0_i32 : i32, i32
  }
  func.func @transform_1(%arg0: i32) -> (i32, i32) {
    %c0_i32 = arith.constant 0 : i32
    %c0_i32_0 = arith.constant 0 : i32
    return %arg0, %c0_i32 : i32, i32
  }
  func.func @transform_2(%arg0: i32) -> (i32, i32) {
    %c0_i32 = arith.constant 0 : i32
    %c0_i32_0 = arith.constant 0 : i32
    %c0_i32_1 = arith.constant 0 : i32
    return %c0_i32, %c0_i32_0 : i32, i32
  }
  func.func @transform_3(%arg0: i32) -> (i32, i32) {
    %c0_i32 = arith.constant 0 : i32
    %c0_i32_0 = arith.constant 0 : i32
    %c0_i32_1 = arith.constant 0 : i32
    return %c0_i32, %c0_i32_0 : i32, i32
  }
  func.func @transform_4(%arg0: i32) -> (i32, i32) {
    %c0_i32 = arith.constant 0 : i32
    %c0_i32_0 = arith.constant 0 : i32
    %c0_i32_1 = arith.constant 0 : i32
    return %c0_i32, %c0_i32_0 : i32, i32
  }
  func.func @transform_5(%arg0: i32) -> (i32, i32) {
    %c0_i32 = arith.constant 0 : i32
    %c0_i32_0 = arith.constant 0 : i32
    %c0_i32_1 = arith.constant 0 : i32
    return %c0_i32, %c0_i32_0 : i32, i32
  }
  func.func @transform_6(%arg0: i32) -> (i32, i32) {
    %c0_i32 = arith.constant 0 : i32
    %c0_i32_0 = arith.constant 0 : i32
    %c0_i32_1 = arith.constant 0 : i32
    return %c0_i32, %c0_i32_0 : i32, i32
  }
  func.func @transform_7(%arg0: i32) -> (i32, i32) {
    %c0_i32 = arith.constant 0 : i32
    %c0_i32_0 = arith.constant 0 : i32
    %c0_i32_1 = arith.constant 0 : i32
    return %c0_i32, %c0_i32_0 : i32, i32
  }
  func.func @transform_8(%arg0: i32) -> (i32, i32) {
    %c0_i32 = arith.constant 0 : i32
    %c0_i32_0 = arith.constant 0 : i32
    return %arg0, %c0_i32 : i32, i32
  }
}

</mosaic_0001>

<llo_original>
// kernel: gru_cell_forward.1
$region0: #{gru_cell_forward.1}
  #allocation0 [shape = 'u32[]', space=smem, size = 0x4, offset = 0x4, fixed_abs, tag = 'smem constant byte address 0x4 - core index']
  #allocation1 [shape = 'u32[144,128]{1,0:T(1,128)}', space=vmem, size = 0x12000, scoped, tag = 'internal scratch']
  #allocation2 [shape = 'f32[16,32]{1,0:T(8,128)}', space=vmem, size = 0x2000, scoped, tag = 'scratch operand']
  %s0 = inlined_call_operand.vmem [shape: f32[32,1], index: 0, kind: input, shape index: {}]
  %s1 = inlined_call_operand.vmem [shape: bf16[32,32], index: 1, kind: input, shape index: {}]
  %s2 = inlined_call_operand.vmem [shape: f32[1,64], index: 2, kind: input, shape index: {}]
  %s3 = inlined_call_operand.vmem [shape: f32[32,64], index: 3, kind: input, shape index: {}]
  %s4 = inlined_call_operand.vmem [shape: f32[1,64], index: 4, kind: input, shape index: {}]
  %s5 = inlined_call_operand.vmem [shape: f32[1,32], index: 5, kind: input, shape index: {}]
  %s6 = inlined_call_operand.vmem [shape: f32[64,64], index: 6, kind: input, shape index: {}]
  %s7 = inlined_call_operand.vmem [shape: f32[1,64], index: 7, kind: input, shape index: {}]
  %s8 = inlined_call_operand.vmem [shape: f32[16,64], index: 8, kind: output, shape index: {}]
  %s9 = sld [smem:[#allocation0]]
  $region65: #{gru_cell_forward.1} parent=0
    _
  %s11 = ssub.s32 1, %s9
  %s12 = scalar_select 0, %s11, %s9
  loop: start=0, step=1, limit=4
  $region2: #{gru_cell_forward.1} parent=0 // loop_pre_header
    _
  $region3: #{gru_cell_forward.1} parent=0 // loop_header
    %s14 = sphi 0, %s18
    %p15 = scmp.ge.s32.totalorder %s14, 4
    %s24 = sphi 0, %s26
    %s27 = sphi 0, %s24
    %s28 = sphi 0, %s27
    %s44 = sphi 0, %s28
    %s50 = sphi 0, %s52
    %s53 = sphi 0, %s50
    %s54 = sphi 0, %s53
    %s70 = sphi 0, %s54
    %s74 = sphi 0, %s74
    %s76 = sphi 0, %s74
    %s77 = sphi 0, %s76
    %s91 = sphi 0, %s77
    %s95 = sphi 0, %s95
    %s97 = sphi 0, %s95
    %s98 = sphi 0, %s97
    %s112 = sphi 0, %s98
    %s116 = sphi 0, %s116
    %s118 = sphi 0, %s116
    %s119 = sphi 0, %s118
    %s133 = sphi 0, %s119
    %s137 = sphi 0, %s137
    %s139 = sphi 0, %s137
    %s140 = sphi 0, %s139
    %s154 = sphi 0, %s140
    %s158 = sphi 0, %s158
    %s160 = sphi 0, %s158
    %s161 = sphi 0, %s160
    %s175 = sphi 0, %s161
    %s179 = sphi 0, %s179
    %s181 = sphi 0, %s179
    %s182 = sphi 0, %s181
    %s196 = sphi 0, %s182
    %s202 = sphi 0, %s204
    %s205 = sphi 0, %s202
    %s206 = sphi 0, %s205
    %s222 = sphi 0, %s206
  $region4: #{gru_cell_forward.1} parent=0 // loop_header_branch
    %17 = sbr.rel (%p15) target = $region8
  $region5: #{gru_cell_forward.1} parent=0 // loop_body
    %s19 = ssub.s32 %s14, 1
    %s20 = ssub.s32 %s14, 2
    %s21 = sadd.s32 %s14, 1
    %s22 = ssub.s32 %s14, %s21
    %p23 = scmp.eq.s32.totalorder %s22, 0
    %s25 = sadd.s32 %s24, 1
    %s26 = scalar_select %p23, %s24, %s25
    %p29 = pneg %p23
    %p30 = scmp.eq.s32.totalorder %s14, 1
    %p31 = por %p29, %p30
    %p32 = scmp.ne.s32.totalorder %s24, %s27
    %p33 = scmp.eq.s32.totalorder %s14, 0
    %p34 = por %p32, %p33
    %p35 = scmp.ne.s32.totalorder %s24, %s27
    %p36 = scmp.eq.s32.totalorder %s19, 1
    %p37 = por %p35, %p36
    %p38 = scmp.ne.s32.totalorder %s27, %s28
    %p39 = scmp.eq.s32.totalorder %s19, 0
    %p40 = por %p38, %p39
    %p41 = scmp.ne.s32.totalorder %s27, %s28
    %p42 = scmp.eq.s32.totalorder %s20, 1
    %p43 = por %p41, %p42
    %p45 = scmp.ne.s32.totalorder %s28, %s44
    %p46 = scmp.eq.s32.totalorder %s20, 0
    %p47 = por %p45, %p46
    %s48 = ssub.s32 %s14, %s21
    %p49 = scmp.eq.s32.totalorder %s48, 0
    %s51 = sadd.s32 %s50, 1
    %s52 = scalar_select %p49, %s50, %s51
    %p55 = pneg %p49
    %p56 = scmp.eq.s32.totalorder %s14, 1
    %p57 = por %p55, %p56
    %p58 = scmp.ne.s32.totalorder %s50, %s53
    %p59 = scmp.eq.s32.totalorder %s14, 0
    %p60 = por %p58, %p59
    %p61 = scmp.ne.s32.totalorder %s50, %s53
    %p62 = scmp.eq.s32.totalorder %s19, 1
    %p63 = por %p61, %p62
    %p64 = scmp.ne.s32.totalorder %s53, %s54
    %p65 = scmp.eq.s32.totalorder %s19, 0
    %p66 = por %p64, %p65
    %p67 = scmp.ne.s32.totalorder %s53, %s54
    %p68 = scmp.eq.s32.totalorder %s20, 1
    %p69 = por %p67, %p68
    %p71 = scmp.ne.s32.totalorder %s54, %s70
    %p72 = scmp.eq.s32.totalorder %s20, 0
    %p73 = por %p71, %p72
    %s75 = sadd.s32 %s74, 1
    %p78 = scmp.eq.s32.totalorder %s14, 1
    %p79 = scmp.ne.s32.totalorder %s74, %s76
    %p80 = scmp.eq.s32.totalorder %s14, 0
    %p81 = por %p79, %p80
    %p82 = scmp.ne.s32.totalorder %s74, %s76
    %p83 = scmp.eq.s32.totalorder %s19, 1
    %p84 = por %p82, %p83
    %p85 = scmp.ne.s32.totalorder %s76, %s77
    %p86 = scmp.eq.s32.totalorder %s19, 0
    %p87 = por %p85, %p86
    %p88 = scmp.ne.s32.totalorder %s76, %s77
    %p89 = scmp.eq.s32.totalorder %s20, 1
    %p90 = por %p88, %p89
    %p92 = scmp.ne.s32.totalorder %s77, %s91
    %p93 = scmp.eq.s32.totalorder %s20, 0
    %p94 = por %p92, %p93
    %s96 = sadd.s32 %s95, 1
    %p99 = scmp.eq.s32.totalorder %s14, 1
    %p100 = scmp.ne.s32.totalorder %s95, %s97
    %p101 = scmp.eq.s32.totalorder %s14, 0
    %p102 = por %p100, %p101
    %p103 = scmp.ne.s32.totalorder %s95, %s97
    %p104 = scmp.eq.s32.totalorder %s19, 1
    %p105 = por %p103, %p104
    %p106 = scmp.ne.s32.totalorder %s97, %s98
    %p107 = scmp.eq.s32.totalorder %s19, 0
    %p108 = por %p106, %p107
    %p109 = scmp.ne.s32.totalorder %s97, %s98
    %p110 = scmp.eq.s32.totalorder %s20, 1
    %p111 = por %p109, %p110
    %p113 = scmp.ne.s32.totalorder %s98, %s112
    %p114 = scmp.eq.s32.totalorder %s20, 0
    %p115 = por %p113, %p114
    %s117 = sadd.s32 %s116, 1
    %p120 = scmp.eq.s32.totalorder %s14, 1
    %p121 = scmp.ne.s32.totalorder %s116, %s118
    %p122 = scmp.eq.s32.totalorder %s14, 0
    %p123 = por %p121, %p122
    %p124 = scmp.ne.s32.totalorder %s116, %s118
    %p125 = scmp.eq.s32.totalorder %s19, 1
    %p126 = por %p124, %p125
    %p127 = scmp.ne.s32.totalorder %s118, %s119
    %p128 = scmp.eq.s32.totalorder %s19, 0
    %p129 = por %p127, %p128
    %p130 = scmp.ne.s32.totalorder %s118, %s119
    %p131 = scmp.eq.s32.totalorder %s20, 1
    %p132 = por %p130, %p131
    %p134 = scmp.ne.s32.totalorder %s119, %s133
    %p135 = scmp.eq.s32.totalorder %s20, 0
    %p136 = por %p134, %p135
    %s138 = sadd.s32 %s137, 1
    %p141 = scmp.eq.s32.totalorder %s14, 1
    %p142 = scmp.ne.s32.totalorder %s137, %s139
    %p143 = scmp.eq.s32.totalorder %s14, 0
    %p144 = por %p142, %p143
    %p145 = scmp.ne.s32.totalorder %s137, %s139
    %p146 = scmp.eq.s32.totalorder %s19, 1
    %p147 = por %p145, %p146
    %p148 = scmp.ne.s32.totalorder %s139, %s140
    %p149 = scmp.eq.s32.totalorder %s19, 0
    %p150 = por %p148, %p149
    %p151 = scmp.ne.s32.totalorder %s139, %s140
    %p152 = scmp.eq.s32.totalorder %s20, 1
    %p153 = por %p151, %p152
    %p155 = scmp.ne.s32.totalorder %s140, %s154
    %p156 = scmp.eq.s32.totalorder %s20, 0
    %p157 = por %p155, %p156
    %s159 = sadd.s32 %s158, 1
    %p162 = scmp.eq.s32.totalorder %s14, 1
    %p163 = scmp.ne.s32.totalorder %s158, %s160
    %p164 = scmp.eq.s32.totalorder %s14, 0
    %p165 = por %p163, %p164
    %p166 = scmp.ne.s32.totalorder %s158, %s160
    %p167 = scmp.eq.s32.totalorder %s19, 1
    %p168 = por %p166, %p167
    %p169 = scmp.ne.s32.totalorder %s160, %s161
    %p170 = scmp.eq.s32.totalorder %s19, 0
    %p171 = por %p169, %p170
    %p172 = scmp.ne.s32.totalorder %s160, %s161
    %p173 = scmp.eq.s32.totalorder %s20, 1
    %p174 = por %p172, %p173
    %p176 = scmp.ne.s32.totalorder %s161, %s175
    %p177 = scmp.eq.s32.totalorder %s20, 0
    %p178 = por %p176, %p177
    %s180 = sadd.s32 %s179, 1
    %p183 = scmp.eq.s32.totalorder %s14, 1
    %p184 = scmp.ne.s32.totalorder %s179, %s181
    %p185 = scmp.eq.s32.totalorder %s14, 0
    %p186 = por %p184, %p185
    %p187 = scmp.ne.s32.totalorder %s179, %s181
    %p188 = scmp.eq.s32.totalorder %s19, 1
    %p189 = por %p187, %p188
    %p190 = scmp.ne.s32.totalorder %s181, %s182
    %p191 = scmp.eq.s32.totalorder %s19, 0
    %p192 = por %p190, %p191
    %p193 = scmp.ne.s32.totalorder %s181, %s182
    %p194 = scmp.eq.s32.totalorder %s20, 1
    %p195 = por %p193, %p194
    %p197 = scmp.ne.s32.totalorder %s182, %s196
    %p198 = scmp.eq.s32.totalorder %s20, 0
    %p199 = por %p197, %p198
    %s200 = ssub.s32 %s14, %s21
    %p201 = scmp.eq.s32.totalorder %s200, 0
    %s203 = sadd.s32 %s202, 1
    %s204 = scalar_select %p201, %s202, %s203
    %p207 = pneg %p201
    %p208 = scmp.eq.s32.totalorder %s14, 1
    %p209 = por %p207, %p208
    %p210 = scmp.ne.s32.totalorder %s202, %s205
    %p211 = scmp.eq.s32.totalorder %s14, 0
    %p212 = por %p210, %p211
    %p213 = scmp.ne.s32.totalorder %s202, %s205
    %p214 = scmp.eq.s32.totalorder %s19, 1
    %p215 = por %p213, %p214
    %p216 = scmp.ne.s32.totalorder %s205, %s206
    %p217 = scmp.eq.s32.totalorder %s19, 0
    %p218 = por %p216, %p217
    %p219 = scmp.ne.s32.totalorder %s205, %s206
    %p220 = scmp.eq.s32.totalorder %s20, 1
    %p221 = por %p219, %p220
    %p223 = scmp.ne.s32.totalorder %s206, %s222
    %p224 = scmp.eq.s32.totalorder %s20, 0
    %p225 = por %p223, %p224
    %p226 = scmp.le.s32.totalorder 1, %s14
    %p227 = scmp.lt.s32.totalorder %s14, 3
    %p228 = pnand %p226, %p227
    %p229 = pneg %p228
    // Predicated region
    $region9: #{gru_cell_forward.1} parent=5 // pred_check
      _
    $region10: #{gru_cell_forward.1} parent=5 // pred_check_branch
      %231 = sbr.rel (%p228) target = $region12
    $region11: #{gru_cell_forward.1} parent=5 // pred_region
      %s232 = ssub.s32 %s14, 1
      // Predicated region
      $region13: #{gru_cell_forward.1} parent=11 // pred_check
        %p233 = pneg %p87
      $region14: #{gru_cell_forward.1} parent=11 // pred_check_branch
        %235 = sbr.rel (%p233) target = $region16
      $region15: #{gru_cell_forward.1} parent=11 // pred_region
        _
      $region16: #{gru_cell_forward.1} parent=11 // pred_fallthru
        _
      // Predicated region
      $region17: #{gru_cell_forward.1} parent=11 // pred_check
        %p236 = pneg %p108
      $region18: #{gru_cell_forward.1} parent=11 // pred_check_branch
        %238 = sbr.rel (%p236) target = $region20
      $region19: #{gru_cell_forward.1} parent=11 // pred_region
        _
      $region20: #{gru_cell_forward.1} parent=11 // pred_fallthru
        _
      // Predicated region
      $region21: #{gru_cell_forward.1} parent=11 // pred_check
        %p239 = pneg %p129
      $region22: #{gru_cell_forward.1} parent=11 // pred_check_branch
        %241 = sbr.rel (%p239) target = $region24
      $region23: #{gru_cell_forward.1} parent=11 // pred_region
        _
      $region24: #{gru_cell_forward.1} parent=11 // pred_fallthru
        _
      // Predicated region
      $region25: #{gru_cell_forward.1} parent=11 // pred_check
        %p242 = pneg %p150
      $region26: #{gru_cell_forward.1} parent=11 // pred_check_branch
        %244 = sbr.rel (%p242) target = $region28
      $region27: #{gru_cell_forward.1} parent=11 // pred_region
        _
      $region28: #{gru_cell_forward.1} parent=11 // pred_fallthru
        _
      // Predicated region
      $region29: #{gru_cell_forward.1} parent=11 // pred_check
        %p245 = pneg %p171
      $region30: #{gru_cell_forward.1} parent=11 // pred_check_branch
        %247 = sbr.rel (%p245) target = $region32
      $region31: #{gru_cell_forward.1} parent=11 // pred_region
        _
      $region32: #{gru_cell_forward.1} parent=11 // pred_fallthru
        _
      // Predicated region
      $region33: #{gru_cell_forward.1} parent=11 // pred_check
        %p248 = pneg %p192
      $region34: #{gru_cell_forward.1} parent=11 // pred_check_branch
        %250 = sbr.rel (%p248) target = $region36
      $region35: #{gru_cell_forward.1} parent=11 // pred_region
        _
      $region36: #{gru_cell_forward.1} parent=11 // pred_fallthru
        _
    $region12: #{gru_cell_forward.1} parent=5 // pred_fallthru
      _
    %p251 = scmp.lt.s32.totalorder %s14, 2
    // Predicated region
    $region37: #{gru_cell_forward.1} parent=5 // pred_check
      %p252 = pneg %p251
    $region38: #{gru_cell_forward.1} parent=5 // pred_check_branch
      %254 = sbr.rel (%p252) target = $region40
    $region39: #{gru_cell_forward.1} parent=5 // pred_region
      // Predicated region
      $region41: #{gru_cell_forward.1} parent=39 // pred_check
        %p255 = pneg %p34
      $region42: #{gru_cell_forward.1} parent=39 // pred_check_branch
        %257 = sbr.rel (%p255) target = $region44
      $region43: #{gru_cell_forward.1} parent=39 // pred_region
        %s258 = smul.u32 2, %s14
        %p259 = scmp.lt.s32.totalorder %s258, 3
        %s260 = scalar_select %p259, %s258, 3
        %s261 = smul.addr %s260, 8
        %s262 = scalar_lea.vmem %s0, %s261
        %s263 = smul.u32 2, %s14
      $region44: #{gru_cell_forward.1} parent=39 // pred_fallthru
        _
      // Predicated region
      $region45: #{gru_cell_forward.1} parent=39 // pred_check
        %p264 = pneg %p60
      $region46: #{gru_cell_forward.1} parent=39 // pred_check_branch
        %266 = sbr.rel (%p264) target = $region48
      $region47: #{gru_cell_forward.1} parent=39 // pred_region
        %s267 = smul.u32 2, %s14
        %p268 = scmp.lt.s32.totalorder %s267, 3
        %s269 = scalar_select %p268, %s267, 3
        %s270 = smul.addr %s269, 4
        %s271 = scalar_lea.vmem %s1, %s270
        %s272 = smul.u32 2, %s14
      $region48: #{gru_cell_forward.1} parent=39 // pred_fallthru
        _
    $region40: #{gru_cell_forward.1} parent=5 // pred_fallthru
      _
    %p273 = scmp.le.s32.totalorder 1, %s14
    %p274 = scmp.lt.s32.totalorder %s14, 3
    %p275 = pnand %p273, %p274
    %p276 = pneg %p275
    // Predicated region
    $region49: #{gru_cell_forward.1} parent=5 // pred_check
      _
    $region50: #{gru_cell_forward.1} parent=5 // pred_check_branch
      %278 = sbr.rel (%p275) target = $region52
    $region51: #{gru_cell_forward.1} parent=5 // pred_region
      %s279 = ssub.s32 %s14, 1
      %s280 = smul.u32 2, %s19
      %p281 = scmp.lt.s32.totalorder %s280, 3
      %s282 = scalar_select %p281, %s280, 3
      %s283 = smul.addr %s282, 8
      %s284 = scalar_lea.vmem %s0, %s283
      %p285 = pneg %p40
      %p286 = pneg %p37
      %s287 = smul.u32 2, %s19
      %p288 = scmp.lt.s32.totalorder %s287, 3
      %s289 = scalar_select %p288, %s287, 3
      %s290 = smul.addr %s289, 4
      %s291 = scalar_lea.vmem %s1, %s290
      %p292 = pneg %p66
      %p293 = pneg %p63
      %p294 = pneg %p87
      %p295 = pneg %p84
      %p296 = pneg %p108
      %p297 = pneg %p105
      %p298 = pneg %p129
      %p299 = pneg %p126
      %p300 = pneg %p150
      %p301 = pneg %p147
      %p302 = pneg %p171
      %p303 = pneg %p168
      %p304 = pneg %p192
      %p305 = pneg %p189
      %p306 = pneg %p218
      %p307 = pneg %p215
      %p308 = scmp.lt.s32.totalorder %s19, 1
      %s309 = scalar_select %p308, %s19, 1
      %s310 = smul.addr %s309, 8
      %s311 = scalar_lea.vmem %s8, %s310
      %s312 = smul.u32 2, %s19
      %p313 = scmp.lt.s32.totalorder %s312, 3
      %s314 = scalar_select %p313, %s312, 3
      %s315 = smul.addr %s314, 8
      %s316 = scalar_lea.vmem %s0, %s315
      %s317 = smul.u32 2, %s19
      %s318 = smul.u32 2, %s19
      %p319 = scmp.lt.s32.totalorder %s318, 3
      %s320 = scalar_select %p319, %s318, 3
      %s321 = smul.addr %s320, 4
      %s322 = scalar_lea.vmem %s1, %s321
      %s323 = smul.u32 2, %s19
      %p324 = scmp.lt.s32.totalorder %s19, 1
      %s325 = scalar_select %p324, %s19, 1
      %s326 = smul.addr %s325, 8
      %s327 = scalar_lea.vmem %s8, %s326
      %v328 = vld [vmem:[%s322] sm:$0xf]
      %v329 = vld [vmem:[%s322 + $0x4] sm:$0xf]
      %v330 = vunpack.c.l.bf16 %v328
      %v331 = vunpack.c.l.bf16 %v329
      %vm332 = vcmask 261120
      %333 = vst.msk [vmem:[#allocation2] sm:$0xff] %vm332, %v330
      %334 = vst.msk [vmem:[#allocation2 + $0x8] sm:$0xff] %vm332, %v331
      %v335 = vld [vmem:[%s316] sm:$0xff]
      %v336 = vld [vmem:[%s316 + $0x8] sm:$0xff]
      %v337 = vld [vmem:[%s2] sm:$0x1]
      %v338 = vld [vmem:[%s4] sm:$0x1]
      %v339 = vld [vmem:[%s3] sm:$0xff]
      %v340 = vld [vmem:[%s3 + $0x8] sm:$0xff]
      %v341 = vld [vmem:[%s3 + $0x10] sm:$0xff]
      %v342 = vld [vmem:[%s3 + $0x18] sm:$0xff]
      %344 = vset.pattern.permute.xlu0 0
      %345 = vperm.xlu0 %344, %v335
      %v346 = vpop.permute.xlu0 %345
      %349 = vset.pattern.permute.xlu0 0
      %350 = vperm.xlu0 %349, %v336
      %v351 = vpop.permute.xlu0 %350
      %v354 = vlaneseq
      %v355 = vshrl.u32 %v354, 7
      %v356 = vsub.s32 0, %v355
      %v357 = vrot.slane %v337, %v356
      %v359 = vmul.f32 %v346, %v357
      %v360 = vmul.f32 %v351, %v357
      %v362 = vsel %vm332, %v330, 0
      %v365 = vsel %vm332, %v331, 0
      %367 = vmatprep.subr.mxu0 0.0
      %368 = vmatpush1.msra.mxu0 0.0
      %369 = vmatprep.subr.mxu0 0.0
      %370 = vmatpush1.msra.mxu0 0.0
      %371 = vmatprep.subr.mxu0 0.0
      %372 = vmatpush1.msra.mxu0 0.0
      %373 = vmatprep.subr.mxu0 0.0
      %374 = vmatpush1.msra.mxu0 0.0
      %375 = vmatprep.subr.mxu0 0.0
      %376 = vmatpush1.msra.mxu0 0.0
      %377 = vmatprep.subr.mxu0 0.0
      %378 = vmatpush1.msra.mxu0 0.0
      %379 = vmatprep.subr.mxu0 0.0
      %380 = vmatpush1.msra.mxu0 0.0
      %381 = vmatprep.subr.mxu0 0.0
      %382 = vmatpush1.msra.mxu0 0.0
      %383 = vmatprep.subr.mxu0 0.0
      %384 = vmatpush1.msra.mxu0 0.0
      %385 = vmatprep.subr.mxu0 0.0
      %386 = vmatpush1.msra.mxu0 0.0
      %387 = vmatprep.subr.mxu0 0.0
      %388 = vmatpush1.msra.mxu0 0.0
      %389 = vmatprep.subr.mxu0 0.0
      %390 = vmatpush1.msra.mxu0 0.0
      %391 = vmatprep.subr.mxu0 0.0
      %392 = vmatpush1.msra.mxu0 %v342
      %393 = vmatprep.subr.mxu0 0.0
      %394 = vmatpush1.msra.mxu0 %v341
      %395 = vmatprep.subr.mxu0 0.0
      %396 = vmatpush1.msra.mxu0 %v340
      %397 = vmatprep.subr.mxu0 0.0
      %398 = vmatpush1.msra.mxu0 %v339
      %399 = vmatprep.subr.mxu0 0.0
      %400 = vmatpush2.msra.mxu0 0.0
      %401 = vmatprep.subr.mxu0 0.0
      %402 = vmatpush2.msra.mxu0 0.0
      %403 = vmatprep.subr.mxu0 0.0
      %404 = vmatpush2.msra.mxu0 0.0
      %405 = vmatprep.subr.mxu0 0.0
      %406 = vmatpush2.msra.mxu0 0.0
      %407 = vmatprep.subr.mxu0 0.0
      %408 = vmatpush2.msra.mxu0 0.0
      %409 = vmatprep.subr.mxu0 0.0
      %410 = vmatpush2.msra.mxu0 0.0
      %411 = vmatprep.subr.mxu0 0.0
      %412 = vmatpush2.msra.mxu0 0.0
      %413 = vmatprep.subr.mxu0 0.0
      %414 = vmatpush2.msra.mxu0 0.0
      %415 = vmatprep.subr.mxu0 0.0
      %416 = vmatpush2.msra.mxu0 0.0
      %417 = vmatprep.subr.mxu0 0.0
      %418 = vmatpush2.msra.mxu0 0.0
      %419 = vmatprep.subr.mxu0 0.0
      %420 = vmatpush2.msra.mxu0 0.0
      %421 = vmatprep.subr.mxu0 0.0
      %422 = vmatpush2.msra.mxu0 0.0
      %423 = vmatprep.subr.mxu0 0.0
      %424 = vmatpush2.msra.mxu0 0.0
      %425 = vmatprep.subr.mxu0 0.0
      %426 = vmatpush2.msra.mxu0 0.0
      %427 = vmatprep.subr.mxu0 0.0
      %428 = vmatpush2.msra.mxu0 0.0
      %429 = vmatprep.subr.mxu0 0.0
      %430 = vmatpush2.msra.mxu0 0.0
      %431 = vmatprep.mubr.f32.mxu0 0.0
      %432 = vmatmul.mubr.f32.gmra.mxu0 %v362
      %v433 = vpop.f32.mrf.mxu0
      %v434 = vadd.f32 %v359, %v433
      %v435 = vpop.f32.mrf.mxu0
      %436 = vmatprep.mubr.f32.mxu0 0.0
      %437 = vmatmul.mubr.f32.gmra.mxu0 %v365
      %v438 = vpop.f32.mrf.mxu0
      %v439 = vadd.f32 %v360, %v438
      %v440 = vpop.f32.mrf.mxu0
      %441 = vdwg.mxu0
      %v443 = vlaneseq
      %v444 = vshrl.u32 %v443, 7
      %v445 = vsub.s32 0, %v444
      %v446 = vrot.slane %v338, %v445
      %v448 = vadd.f32 %v434, %v446
      %v449 = vadd.f32 %v439, %v446
      %v450 = vmul.f32 %v448, 0.5
      %v451 = vmul.f32 %v449, 0.5
      %v452 = vtanh.pop %v450
      %v453 = vtanh.pop %v451
      %v454 = vadd.f32 %v452, 1.0
      %v455 = vadd.f32 %v453, 1.0
      %v456 = vmul.f32 %v454, 0.5
      %v457 = vmul.f32 %v455, 0.5
      %v458 = vld [vmem:[#allocation2] ss:$2 sm:$0xff]
      %s459 = scalar_lea.vmem [#allocation2], 1
      %v460 = vld [vmem:[%s459] ss:$2 sm:$0xff]
      %462 = vrot.lane.b32.xlu0 %v460, 32
      %v463 = vpop.permute.xlu0 %462
      %v465 = vsel %vm332, %v458, %v463
      %v466 = vld [vmem:[%s316] ss:$2 sm:$0xff]
      %s467 = scalar_lea.vmem %s316, 1
      %v468 = vld [vmem:[%s467] ss:$2 sm:$0xff]
      %v469 = vld [vmem:[%s5] sm:$0x1]
      %v470 = vmul.f32 %v456, %v465
      %v471 = vld [vmem:[%s6] sm:$0xff]
      %v472 = vld [vmem:[%s6 + $0x8] sm:$0xff]
      %v473 = vld [vmem:[%s6 + $0x10] sm:$0xff]
      %v474 = vld [vmem:[%s6 + $0x18] sm:$0xff]
      %v475 = vld [vmem:[%s6 + $0x20] sm:$0xff]
      %v476 = vld [vmem:[%s6 + $0x28] sm:$0xff]
      %v477 = vld [vmem:[%s6 + $0x30] sm:$0xff]
      %v478 = vld [vmem:[%s6 + $0x38] sm:$0xff]
      %480 = vset.pattern.permute.xlu0 0
      %481 = vperm.xlu0 %480, %v466
      %v482 = vpop.permute.xlu0 %481
      %v485 = vlaneseq
      %v486 = vshrl.u32 %v485, 7
      %v487 = vsub.s32 0, %v486
      %v488 = vrot.slane %v469, %v487
      %v490 = vmul.f32 %v482, %v488
      %492 = vset.pattern.permute.xlu0 0
      %493 = vperm.xlu0 %492, %v468
      %v494 = vpop.permute.xlu0 %493
      %v496 = vmul.f32 %v494, %v488
      %498 = vrot.lane.b32.xlu0 %v496, 32
      %v499 = vpop.permute.xlu0 %498
      %v501 = vsel %vm332, %v490, %v499
      %vm502 = vcmask 523264
      %v504 = vsel %vm502, %v470, 0
      %506 = vmatprep.subr.mxu0 0.0
      %507 = vmatpush1.msra.mxu0 0.0
      %508 = vmatprep.subr.mxu0 0.0
      %509 = vmatpush1.msra.mxu0 0.0
      %510 = vmatprep.subr.mxu0 0.0
      %511 = vmatpush1.msra.mxu0 0.0
      %512 = vmatprep.subr.mxu0 0.0
      %513 = vmatpush1.msra.mxu0 0.0
      %514 = vmatprep.subr.mxu0 0.0
      %515 = vmatpush1.msra.mxu0 0.0
      %516 = vmatprep.subr.mxu0 0.0
      %517 = vmatpush1.msra.mxu0 0.0
      %518 = vmatprep.subr.mxu0 0.0
      %519 = vmatpush1.msra.mxu0 0.0
      %520 = vmatprep.subr.mxu0 0.0
      %521 = vmatpush1.msra.mxu0 0.0
      %522 = vmatprep.subr.mxu0 0.0
      %523 = vmatpush1.msra.mxu0 %v478
      %524 = vmatprep.subr.mxu0 0.0
      %525 = vmatpush1.msra.mxu0 %v477
      %526 = vmatprep.subr.mxu0 0.0
      %527 = vmatpush1.msra.mxu0 %v476
      %528 = vmatprep.subr.mxu0 0.0
      %529 = vmatpush1.msra.mxu0 %v475
      %530 = vmatprep.subr.mxu0 0.0
      %531 = vmatpush1.msra.mxu0 %v474
      %532 = vmatprep.subr.mxu0 0.0
      %533 = vmatpush1.msra.mxu0 %v473
      %534 = vmatprep.subr.mxu0 0.0
      %535 = vmatpush1.msra.mxu0 %v472
      %536 = vmatprep.subr.mxu0 0.0
      %537 = vmatpush1.msra.mxu0 %v471
      %538 = vmatprep.subr.mxu0 0.0
      %539 = vmatpush2.msra.mxu0 0.0
      %540 = vmatprep.subr.mxu0 0.0
      %541 = vmatpush2.msra.mxu0 0.0
      %542 = vmatprep.subr.mxu0 0.0
      %543 = vmatpush2.msra.mxu0 0.0
      %544 = vmatprep.subr.mxu0 0.0
      %545 = vmatpush2.msra.mxu0 0.0
      %546 = vmatprep.subr.mxu0 0.0
      %547 = vmatpush2.msra.mxu0 0.0
      %548 = vmatprep.subr.mxu0 0.0
      %549 = vmatpush2.msra.mxu0 0.0
      %550 = vmatprep.subr.mxu0 0.0
      %551 = vmatpush2.msra.mxu0 0.0
      %552 = vmatprep.subr.mxu0 0.0
      %553 = vmatpush2.msra.mxu0 0.0
      %554 = vmatprep.subr.mxu0 0.0
      %555 = vmatpush2.msra.mxu0 0.0
      %556 = vmatprep.subr.mxu0 0.0
      %557 = vmatpush2.msra.mxu0 0.0
      %558 = vmatprep.subr.mxu0 0.0
      %559 = vmatpush2.msra.mxu0 0.0
      %560 = vmatprep.subr.mxu0 0.0
      %561 = vmatpush2.msra.mxu0 0.0
      %562 = vmatprep.subr.mxu0 0.0
      %563 = vmatpush2.msra.mxu0 0.0
      %564 = vmatprep.subr.mxu0 0.0
      %565 = vmatpush2.msra.mxu0 0.0
      %566 = vmatprep.subr.mxu0 0.0
      %567 = vmatpush2.msra.mxu0 0.0
      %568 = vmatprep.subr.mxu0 0.0
      %569 = vmatpush2.msra.mxu0 0.0
      %570 = vmatprep.mubr.f32.mxu0 0.0
      %571 = vmatmul.mubr.f32.gmra.mxu0 %v504
      %v572 = vpop.f32.mrf.mxu0
      %v573 = vadd.f32 %v501, %v572
      %v574 = vpop.f32.mrf.mxu0
      %575 = vdwg.mxu0
      %v576 = vld [vmem:[%s7] sm:$0x1]
      %v578 = vlaneseq
      %v579 = vshrl.u32 %v578, 7
      %v580 = vsub.s32 0, %v579
      %v581 = vrot.slane %v576, %v580
      %v583 = vadd.f32 %v573, %v581
      %v584 = vtanh.pop %v583
      %v585 = vmul.f32 %v457, %v465
      %v586 = vsub.f32 1.0, %v457
      %v587 = vmul.f32 %v586, %v584
      %v588 = vadd.f32 %v585, %v587
      %589 = vst.msk [vmem:[%s327] sm:$0xff] %vm502, %v588
      %p590 = scmp.lt.s32.totalorder %s19, 1
      %s591 = scalar_select %p590, %s19, 1
      %s592 = smul.addr %s591, 8
      %s593 = scalar_lea.vmem %s8, %s592
      // Predicated region
      $region53: #{gru_cell_forward.1} parent=51 // pred_check
        %p594 = pneg %p215
      $region54: #{gru_cell_forward.1} parent=51 // pred_check_branch
        %596 = sbr.rel (%p594) target = $region56
      $region55: #{gru_cell_forward.1} parent=51 // pred_region
        _
      $region56: #{gru_cell_forward.1} parent=51 // pred_fallthru
        _
    $region52: #{gru_cell_forward.1} parent=5 // pred_fallthru
      _
    %p597 = scmp.le.s32.totalorder 2, %s14
    // Predicated region
    $region57: #{gru_cell_forward.1} parent=5 // pred_check
      %p598 = pneg %p597
    $region58: #{gru_cell_forward.1} parent=5 // pred_check_branch
      %600 = sbr.rel (%p598) target = $region60
    $region59: #{gru_cell_forward.1} parent=5 // pred_region
      %s601 = ssub.s32 %s14, 2
      // Predicated region
      $region61: #{gru_cell_forward.1} parent=59 // pred_check
        %p602 = pneg %p221
      $region62: #{gru_cell_forward.1} parent=59 // pred_check_branch
        %604 = sbr.rel (%p602) target = $region64
      $region63: #{gru_cell_forward.1} parent=59 // pred_region
        %p605 = scmp.lt.s32.totalorder %s20, 1
        %s606 = scalar_select %p605, %s20, 1
        %s607 = smul.addr %s606, 8
        %s608 = scalar_lea.vmem %s8, %s607
      $region64: #{gru_cell_forward.1} parent=59 // pred_fallthru
        _
    $region60: #{gru_cell_forward.1} parent=5 // pred_fallthru
      _
  $region6: #{gru_cell_forward.1} parent=0 // loop_footer
    %s18 = sadd.s32 1, %s14
  $region7: #{gru_cell_forward.1} parent=0 // loop_footer_branch
    %13 = sbr.rel target = $region3
  $region8: #{gru_cell_forward.1} parent=0 // loop_exit
    _

</llo_original>
